<compile_context>
chip_gen: v5e
topology: v5e:2x2
jax: 0.10.0
libtpu: 0.0.40
codegen_flags: <defaults>
</compile_context>

<pallas_src>
import jax
import jax.numpy as jnp
from jax import lax
from jax.experimental import pallas as pl
from jax.experimental.pallas import tpu as pltpu

HOURS = 24 * 7  # 168


# ---------------------------------------------------------------------------
# Fused kernel: one grid step processes Bt batch elements.
#   idx_ref  : [Bt*S, 3]   int32  absolute joint-table rows (time, loc, user)
#   mat_ref  : [Bt*R, K]   f32    augmented rows [x | x | 1s | 1 | len]
#   cmp_ref  : [Bt*R, K]   f32    constant compare map (-1 | maxij | maxij | -1 | big)
#   wj_ref   : [vtot, E]   f32    concatenated time|location|user table
#   coef_ref : [K, P*E]    f32    block-diagonal folded bilinear coefficients
#   joint_ref: [Bt*S, E]   f32
#   delta_ref: [Bt*R, P*E] f32    lane-packed delta embedding (128-lane stores)
# ---------------------------------------------------------------------------
def _fused_kernel(idx_ref, mat_ref, cmp_ref, wj_ref, coef_ref,
                  joint_ref, delta_ref):
    f32 = jnp.float32

    # --------------- joint embedding: one 3-hot MXU matmul -----------------
    idx = idx_ref[...]                                   # [Bt*S, 3]
    n_tok = idx.shape[0]
    vtot = wj_ref.shape[0]
    lane = lax.broadcasted_iota(jnp.int32, (n_tok, vtot), 1)
    onehot = ((lane == idx[:, 0:1]) | (lane == idx[:, 1:2]) |
              (lane == idx[:, 2:3])).astype(f32)
    # TODO(synk): bf16 one-hot (+ bf16 table) halves LHS bandwidth / spill; kept
    # f32 so the joint output matches the f32 reference at 1e-4 tolerance.
    joint_ref[...] = jnp.dot(onehot, wj_ref[...], preferred_element_type=f32)

    # ---- delta embedding: ONE fused MXU matmul, no epilogue ---------------
    # lhs lanes per packed position become
    #   [ds, dt | m*ds, m*dt | m, 0 | 1 | 0]   (m = max(i,j) < traj_length)
    x_aug = mat_ref[...]                                 # [Bt*R, K]
    kk = x_aug.shape[1]
    length = x_aug[:, kk - 1:kk]                         # per-row length lane
    mult = (cmp_ref[...] < length).astype(f32)           # [Bt*R, K]
    delta_ref[...] = jnp.dot(x_aug * mult, coef_ref[...],
                             preferred_element_type=f32,
                             precision=jax.lax.Precision.HIGHEST)


# ---------------------------------------------------------------------------
# VMEM-aware batch-tile picker (padded, double-buffered block bytes).
# ---------------------------------------------------------------------------
def _pick_batch_tile(B, S, R, E, vtot, budget):
    lp = lambda n: ((n + 127) // 128) * 128
    # idx, joint (S rows) + mat_aug, cmp, delta (R rows): all lane-pad to 128,
    # double-buffered; plus the one-hot intermediate.
    per_b = 1024 * (2 * S + 3 * R) + 4 * S * lp(vtot)
    divisors = [d for d in range(1, B + 1) if B % d == 0]

    def legal(d):  # block second-to-last dims: multiple of 8, or == full array
        return d == B or ((d * S) % 8 == 0 and (d * R) % 8 == 0)

    def fits(d):
        return d * per_b <= budget

    feas = [d for d in divisors if legal(d) and (fits(d) or d == 1)]
    if not feas:
        return B, per_b
    for min_grid in (4, 2, 1):
        cands = [d for d in feas if B // d >= min_grid]
        if cands:
            even = [d for d in cands if (B // d) % 2 == 0]
            return (max(even) if even else max(cands)), per_b
    return max(feas), per_b


# ---------------------------------------------------------------------------
# Wrapper
# ---------------------------------------------------------------------------
def ctr_multi_embedding(traj_input, mat_input, traj_length, params,
                        batch_tile=None, vmem_budget=24 << 20):
    # tables in the same order as the torch module's `embedding_layers`
    w_t, w_l, w_u, w_su, w_sl, w_tu, w_tl = params["tables"]
    ex_su, ex_sl, ex_tu, ex_tl = params["ex"]  # same order as `ex_parameters`

    B, S, _ = traj_input.shape
    E = w_t.shape[1]
    VT, VL, VU = w_t.shape[0], w_l.shape[0], w_u.shape[0]
    vtot = VT + VL + VU
    f32 = jnp.float32

    # TODO(synk): add an un-packed fallback path when E does not divide 128 or
    # S*S is not divisible by 128//E; production shapes violating this fail here.
    assert 128 % E == 0, "lane-packed path requires E to divide 128"
    P = 128 // E
    assert (S * S) % P == 0, "lane-packed path requires S*S divisible by 128//E"
    R = (S * S) // P
    K = 6 * P + 2                     # [x | x | 1s | 1 | len]

    if batch_tile is None:
        Bt, per_b = _pick_batch_tile(B, S, R, E, vtot, vmem_budget)
    else:
        Bt = batch_tile
        assert B % Bt == 0
        assert Bt == B or ((Bt * S) % 8 == 0 and (Bt * R) % 8 == 0)
        _, per_b = _pick_batch_tile(B, S, R, E, vtot, vmem_budget)

    # ---- fold mask tables + ex bounds into six E-vectors (all in f32) ----
    inv_s = 1.0 / (ex_su - ex_sl)
    inv_t = 1.0 / (ex_tu - ex_tl)
    w_sl0, w_su0 = w_sl[0].astype(f32), w_su[0].astype(f32)
    w_tl0, w_tu0 = w_tl[0].astype(f32), w_tu[0].astype(f32)
    dsl, dsu = (w_sl[1] - w_sl[0]).astype(f32), (w_su[1] - w_su[0]).astype(f32)
    dtl, dtu = (w_tl[1] - w_tl[0]).astype(f32), (w_tu[1] - w_tu[0]).astype(f32)

    K0 = inv_s * (w_sl0 * ex_su - w_su0 * ex_sl) + inv_t * (w_tl0 * ex_tu - w_tu0 * ex_tl)
    Km = inv_s * (dsl * ex_su - dsu * ex_sl) + inv_t * (dtl * ex_tu - dtu * ex_tl)
    B0 = inv_s * (w_su0 - w_sl0)
    Bm = inv_s * (dsu - dsl)
    D0 = inv_t * (w_tu0 - w_tl0)
    Dm = inv_t * (dtu - dtl)

    # Single block-diagonal coefficient matrix [K, P*E].
    eyeP = jnp.eye(P, dtype=f32)
    coef = jnp.concatenate([
        jnp.kron(eyeP, jnp.stack([B0, D0])),                    # x lanes
        jnp.kron(eyeP, jnp.stack([Bm, Dm])),                    # masked-x lanes
        jnp.kron(eyeP, jnp.stack([Km, jnp.zeros_like(Km)])),    # mask lanes
        jnp.tile(K0, P)[None, :],                               # constant-1 lane
        jnp.zeros((1, P * E), f32),                             # len lane (unused)
    ], axis=0)                                                  # [K, P*E]

    # Concatenated joint table (rows: time | location | user).
    W_joint = jnp.concatenate([w_t, w_l, w_u], axis=0).astype(f32)   # [vtot, E]

    # Precomputed absolute joint-table row indices (no %168 / adds in-kernel).
    user = traj_input[..., 0].astype(jnp.int32)
    loc = traj_input[..., 1].astype(jnp.int32)
    tim = (traj_input[..., 2].astype(jnp.int32) - 1) % HOURS + 1
    idx_flat = jnp.stack([tim, loc + VT, user + VT + VL],
                         axis=-1).reshape(B * S, 3)                  # [B*S, 3]

    # Augmented (ds, dt) rows: [x | x | 1s | 1 | len].
    x_rows = mat_input.astype(f32).reshape(B * R, 2 * P)             # [B*R, 2P]
    len_lane = jnp.repeat(traj_length.astype(f32), R)[:, None]       # [B*R, 1]
    mat_aug = jnp.concatenate([
        x_rows, x_rows,
        jnp.ones((B * R, 2 * P), f32),
        jnp.ones((B * R, 1), f32),
        len_lane,
    ], axis=1)                                                       # [B*R, K]

    # Batch-invariant compare map: mult = (cmp < len) per lane.
    pos = jnp.arange(S * S, dtype=jnp.int32)
    maxij = jnp.maximum(pos // S, pos % S).astype(f32).reshape(R, P)
    maxij2 = jnp.repeat(maxij, 2, axis=1)                            # [R, 2P]
    cmp_row = jnp.concatenate([
        jnp.full((R, 2 * P), -1.0, f32),      # x lanes -> always pass
        maxij2,                               # masked-x lanes
        maxij2,                               # mask lanes
        jnp.full((R, 1), -1.0, f32),          # constant-1 lane -> always pass
        jnp.full((R, 1), 1e9, f32),           # len lane -> always zeroed
    ], axis=1)                                                       # [R, K]
    cmp_map = jnp.tile(cmp_row, (Bt, 1))                             # [Bt*R, K]

    flops = 2 * B * S * vtot * E + 2 * B * R * K * (P * E)
    bytes_accessed = 4 * (B * S * 3 + B * R * K + Bt * R * K + vtot * E
                          + K * P * E + B * S * E + B * R * P * E)

    joint_flat, delta_packed = pl.pallas_call(
        _fused_kernel,
        out_shape=(jax.ShapeDtypeStruct((B * S, E), f32),
                   jax.ShapeDtypeStruct((B * R, P * E), f32)),
        grid=(B // Bt,),
        in_specs=[
            pl.BlockSpec((Bt * S, 3), lambda b: (b, 0)),             # joint row ids
            pl.BlockSpec((Bt * R, K), lambda b: (b, 0)),             # augmented mat
            pl.BlockSpec((Bt * R, K), lambda b: (0, 0)),             # compare map
            pl.BlockSpec((vtot, E), lambda b: (0, 0)),               # joint table
            pl.BlockSpec((K, P * E), lambda b: (0, 0)),              # coef
        ],
        out_specs=(pl.BlockSpec((Bt * S, E), lambda b: (b, 0)),      # joint
                   pl.BlockSpec((Bt * R, P * E), lambda b: (b, 0))), # delta (packed)
        compiler_params=pltpu.CompilerParams(
            dimension_semantics=("parallel",),
            vmem_limit_bytes=max(32 << 20, min(96 << 20, Bt * per_b + (8 << 20)))),
        cost_estimate=pl.CostEstimate(flops=flops, transcendentals=0,
                                      bytes_accessed=bytes_accessed),
    )(idx_flat, mat_aug, cmp_map, W_joint, coef)

    joint = joint_flat.reshape(B, S, E)
    delta = delta_packed.reshape(B, S, S, E)
    return joint, delta


# ---------------------------------------------------------------------------
# Pure-JAX reference (mirrors the torch forward exactly)
# ---------------------------------------------------------------------------
def reference(traj_input, mat_input, traj_length, params):
    w_t, w_l, w_u, w_su, w_sl, w_tu, w_tl = params["tables"]
    ex_su, ex_sl, ex_tu, ex_tl = params["ex"]
    B, S, _ = traj_input.shape

    t = (traj_input[:, :, 2] - 1) % HOURS + 1
    joint = w_t[t] + w_l[traj_input[:, :, 1]] + w_u[traj_input[:, :, 0]]

    ds = mat_input[..., 0]
    dt = mat_input[..., 1]
    ar = jnp.arange(S)
    mask = ((ar[None, :, None] < traj_length[:, None, None]) &
            (ar[None, None, :] < traj_length[:, None, None])).astype(jnp.int32)
    e_sl, e_su, e_tl, e_tu = w_sl[mask], w_su[mask], w_tl[mask], w_tu[mask]

    v_sl = (ds - ex_sl)[..., None]
    v_su = (ex_su - ds)[..., None]
    v_tl = (dt - ex_tl)[..., None]
    v_tu = (ex_tu - dt)[..., None]
    spatial = (e_sl * v_su + e_su * v_sl) / (ex_su - ex_sl)
    temporal = (e_tl * v_tu + e_tu * v_tl) / (ex_tu - ex_tl)
    return joint, spatial + temporal


if __name__ == "__main__":
    B, S, E = 2, 8, 32
    VT, VL, VU = 176, 24, 16            # time / location / user vocab sizes

    key = jax.random.PRNGKey(0)
    ks = jax.random.split(key, 12)

    # Deterministic synthetic parameters (module's embedding tables & ex bounds).
    w_t = jax.random.normal(ks[0], (VT, E), jnp.float32) * 0.1
    w_l = jax.random.normal(ks[1], (VL, E), jnp.float32) * 0.1
    w_u = jax.random.normal(ks[2], (VU, E), jnp.float32) * 0.1
    w_su = jax.random.normal(ks[3], (2, E), jnp.float32) * 0.1
    w_sl = jax.random.normal(ks[4], (2, E), jnp.float32) * 0.1
    w_tu = jax.random.normal(ks[5], (2, E), jnp.float32) * 0.1
    w_tl = jax.random.normal(ks[6], (2, E), jnp.float32) * 0.1
    params = {
        "tables": (w_t, w_l, w_u, w_su, w_sl, w_tu, w_tl),
        "ex": (100.0, 0.0, 500.0, 0.0),   # (ex_su, ex_sl, ex_tu, ex_tl)
    }

    # Inputs.
    user = jax.random.randint(ks[7], (B, S, 1), 0, VU, jnp.int32)
    loc = jax.random.randint(ks[8], (B, S, 1), 0, VL, jnp.int32)
    tim = jax.random.randint(ks[9], (B, S, 1), 1, 2 * HOURS, jnp.int32)
    traj_input = jnp.concatenate([user, loc, tim], axis=-1)          # [B, S, 3]
    ds = jax.random.uniform(ks[10], (B, S, S, 1), jnp.float32, 0.0, 100.0)
    dt = jax.random.uniform(ks[11], (B, S, S, 1), jnp.float32, 0.0, 500.0)
    mat_input = jnp.concatenate([ds, dt], axis=-1)                   # [B, S, S, 2]
    traj_length = jnp.array([5, 7], jnp.int32)

    joint, delta = ctr_multi_embedding(traj_input, mat_input, traj_length, params)
    joint = jax.block_until_ready(joint)
    delta = jax.block_until_ready(delta)

    joint_ref, delta_ref = reference(traj_input, mat_input, traj_length, params)
    assert joint.shape == (B, S, E) and delta.shape == (B, S, S, E)
    assert bool(jnp.allclose(joint, joint_ref, atol=1e-4, rtol=1e-4))
    assert bool(jnp.allclose(delta, delta_ref, atol=1e-4, rtol=1e-4))

    print("KERNEL_OK")
</pallas_src>

<mosaic_0001>
module attributes {stable_mosaic.version = 11 : i64} {
  func.func @_fused_kernel(%arg0: i32, %arg1: memref<8x3xi32, #tpu.memory_space<vmem>>, %arg2: memref<16x26xf32, #tpu.memory_space<vmem>>, %arg3: memref<16x26xf32, #tpu.memory_space<vmem>>, %arg4: memref<216x32xf32, #tpu.memory_space<vmem>>, %arg5: memref<26x128xf32, #tpu.memory_space<vmem>>, %arg6: memref<8x32xf32, #tpu.memory_space<vmem>>, %arg7: memref<16x128xf32, #tpu.memory_space<vmem>>) attributes {dimension_semantics = [#tpu.dimension_semantics<parallel>], iteration_bounds = array<i64: 2>, scalar_prefetch = 0 : i64, scratch_operands = 0 : i64, tpu.core_type = #tpu.core_type<tc>, window_params = [{transform_indices = @transform_0, window_bounds = array<i64: 8, 3>}, {transform_indices = @transform_1, window_bounds = array<i64: 16, 26>}, {pipeline_mode = #tpu.pipeline_mode<synchronous>, transform_indices = @transform_2, window_bounds = array<i64: 16, 26>}, {pipeline_mode = #tpu.pipeline_mode<synchronous>, transform_indices = @transform_3, window_bounds = array<i64: 216, 32>}, {pipeline_mode = #tpu.pipeline_mode<synchronous>, transform_indices = @transform_4, window_bounds = array<i64: 26, 128>}, {transform_indices = @transform_5, window_bounds = array<i64: 8, 32>}, {transform_indices = @transform_6, window_bounds = array<i64: 16, 128>}]} {
    %c0 = arith.constant 0 : index
    %c0_0 = arith.constant 0 : index
    %0 = vector.load %arg1[%c0, %c0_0] : memref<8x3xi32, #tpu.memory_space<vmem>>, vector<8x3xi32>
    %1 = tpu.iota {dimensions = array<i32: 1>} : vector<8x216xi32>
    %2 = vector.extract_strided_slice %0 {offsets = [0, 0], sizes = [8, 1], strides = [1, 1]} : vector<8x3xi32> to vector<8x1xi32>
    %3 = vector.broadcast %2 : vector<8x1xi32> to vector<8x216xi32>
    %4 = arith.cmpi eq, %1, %3 : vector<8x216xi32>
    %5 = vector.extract_strided_slice %0 {offsets = [0, 1], sizes = [8, 1], strides = [1, 1]} : vector<8x3xi32> to vector<8x1xi32>
    %6 = vector.broadcast %5 : vector<8x1xi32> to vector<8x216xi32>
    %7 = arith.cmpi eq, %1, %6 : vector<8x216xi32>
    %8 = arith.ori %4, %7 : vector<8x216xi1>
    %9 = vector.extract_strided_slice %0 {offsets = [0, 2], sizes = [8, 1], strides = [1, 1]} : vector<8x3xi32> to vector<8x1xi32>
    %10 = vector.broadcast %9 : vector<8x1xi32> to vector<8x216xi32>
    %11 = arith.cmpi eq, %1, %10 : vector<8x216xi32>
    %12 = arith.ori %8, %11 : vector<8x216xi1>
    %13 = arith.extui %12 : vector<8x216xi1> to vector<8x216xi32>
    %14 = arith.sitofp %13 : vector<8x216xi32> to vector<8x216xf32>
    %c0_1 = arith.constant 0 : index
    %c0_2 = arith.constant 0 : index
    %15 = vector.load %arg4[%c0_1, %c0_2] : memref<216x32xf32, #tpu.memory_space<vmem>>, vector<216x32xf32>
    %cst = arith.constant dense<0.000000e+00> : vector<8x32xf32>
    %16 = tpu.matmul %14, %15, %cst {dimension_numbers = #tpu.dot_dimension_numbers<[1], [0], [0], [1], [0, 0, 1, 1], [], []>} : vector<8x216xf32>, vector<216x32xf32>, vector<8x32xf32> -> vector<8x32xf32>
    %c0_3 = arith.constant 0 : index
    %c0_4 = arith.constant 0 : index
    %17 = vector.load %arg6[%c0_3, %c0_4] : memref<8x32xf32, #tpu.memory_space<vmem>>, vector<8x32xf32>
    tpu.vector_store %arg6[%c0_3, %c0_4], %16 {strides = array<i32>} : memref<8x32xf32, #tpu.memory_space<vmem>>, vector<8x32xf32>,
    %c0_5 = arith.constant 0 : index
    %c0_6 = arith.constant 0 : index
    %18 = vector.load %arg2[%c0_5, %c0_6] : memref<16x26xf32, #tpu.memory_space<vmem>>, vector<16x26xf32>
    %19 = vector.extract_strided_slice %18 {offsets = [0, 25], sizes = [16, 1], strides = [1, 1]} : vector<16x26xf32> to vector<16x1xf32>
    %c0_7 = arith.constant 0 : index
    %c0_8 = arith.constant 0 : index
    %20 = vector.load %arg3[%c0_7, %c0_8] : memref<16x26xf32, #tpu.memory_space<vmem>>, vector<16x26xf32>
    %21 = vector.broadcast %19 : vector<16x1xf32> to vector<16x26xf32>
    %22 = arith.cmpf olt, %20, %21 : vector<16x26xf32>
    %23 = arith.extui %22 : vector<16x26xi1> to vector<16x26xi32>
    %24 = arith.sitofp %23 : vector<16x26xi32> to vector<16x26xf32>
    %25 = arith.mulf %18, %24 : vector<16x26xf32>
    %c0_9 = arith.constant 0 : index
    %c0_10 = arith.constant 0 : index
    %26 = vector.load %arg5[%c0_9, %c0_10] : memref<26x128xf32, #tpu.memory_space<vmem>>, vector<26x128xf32>
    %cst_11 = arith.constant dense<0.000000e+00> : vector<16x128xf32>
    %27 = tpu.matmul %25, %26, %cst_11 {dimension_numbers = #tpu.dot_dimension_numbers<[1], [0], [0], [1], [0, 0, 1, 1], [], []>, precision = #tpu.contract_precision<fp32>} : vector<16x26xf32>, vector<26x128xf32>, vector<16x128xf32> -> vector<16x128xf32>
    %c0_12 = arith.constant 0 : index
    %c0_13 = arith.constant 0 : index
    %28 = vector.load %arg7[%c0_12, %c0_13] : memref<16x128xf32, #tpu.memory_space<vmem>>, vector<16x128xf32>
    tpu.vector_store %arg7[%c0_12, %c0_13], %27 {strides = array<i32>} : memref<16x128xf32, #tpu.memory_space<vmem>>, vector<16x128xf32>,
    return
  }
  func.func @transform_0(%arg0: i32) -> (i32, i32) {
    %c0_i32 = arith.constant 0 : i32
    %c0_i32_0 = arith.constant 0 : i32
    return %arg0, %c0_i32 : i32, i32
  }
  func.func @transform_1(%arg0: i32) -> (i32, i32) {
    %c0_i32 = arith.constant 0 : i32
    %c0_i32_0 = arith.constant 0 : i32
    return %arg0, %c0_i32 : i32, i32
  }
  func.func @transform_2(%arg0: i32) -> (i32, i32) {
    %c0_i32 = arith.constant 0 : i32
    %c0_i32_0 = arith.constant 0 : i32
    %c0_i32_1 = arith.constant 0 : i32
    return %c0_i32, %c0_i32_0 : i32, i32
  }
  func.func @transform_3(%arg0: i32) -> (i32, i32) {
    %c0_i32 = arith.constant 0 : i32
    %c0_i32_0 = arith.constant 0 : i32
    %c0_i32_1 = arith.constant 0 : i32
    return %c0_i32, %c0_i32_0 : i32, i32
  }
  func.func @transform_4(%arg0: i32) -> (i32, i32) {
    %c0_i32 = arith.constant 0 : i32
    %c0_i32_0 = arith.constant 0 : i32
    %c0_i32_1 = arith.constant 0 : i32
    return %c0_i32, %c0_i32_0 : i32, i32
  }
  func.func @transform_5(%arg0: i32) -> (i32, i32) {
    %c0_i32 = arith.constant 0 : i32
    %c0_i32_0 = arith.constant 0 : i32
    return %arg0, %c0_i32 : i32, i32
  }
  func.func @transform_6(%arg0: i32) -> (i32, i32) {
    %c0_i32 = arith.constant 0 : i32
    %c0_i32_0 = arith.constant 0 : i32
    return %arg0, %c0_i32 : i32, i32
  }
}

</mosaic_0001>

<llo_original>
// kernel: tpu_custom_call.1
$region0: #{tpu_custom_call.1}
  #allocation0 [shape = 'u32[]', space=smem, size = 0x4, offset = 0x4, fixed_abs, tag = 'smem constant byte address 0x4 - core index']
  #allocation1 [shape = 'u32[72,128]{1,0:T(1,128)}', space=vmem, size = 0x9000, scoped, tag = 'internal scratch']
  %s0 = inlined_call_operand.vmem [shape: s32[16,3], index: 0, kind: input, shape index: {}]
  %s1 = inlined_call_operand.vmem [shape: f32[32,26], index: 1, kind: input, shape index: {}]
  %s2 = inlined_call_operand.vmem [shape: f32[16,26], index: 2, kind: input, shape index: {}]
  %s3 = inlined_call_operand.vmem [shape: f32[216,32], index: 3, kind: input, shape index: {}]
  %s4 = inlined_call_operand.vmem [shape: f32[26,128], index: 4, kind: input, shape index: {}]
  %s5 = inlined_call_operand.hbm [shape: f32[16,32], index: 5, kind: output, shape index: {0}]
  %s6 = inlined_call_operand.hbm [shape: f32[32,128], index: 6, kind: output, shape index: {1}]
  %7 = xla_tuple %s5, %s6
  %s8 = sld [smem:[#allocation0]]
  $region61: #{tpu_custom_call.1} parent=0
    _
  %s10 = ssub.s32 1, %s8
  %s11 = scalar_select 0, %s10, %s8
  $region1: #{tpu_custom_call.1} parent=0
    #allocation2 [shape = 'u8[8192]{0}', space=vmem, size = 0x2000, scoped, tag = 'output window, operand 0']
    #allocation3 [shape = 's32[2]{0}', space=sflag, size = 0x8, scoped, tag = 'scoped memory for tpu_custom_call.1']
    #allocation4 [shape = 'u8[16384]{0}', space=vmem, size = 0x4000, scoped, tag = 'output window, operand 1']
    #allocation5 [shape = 's32[2]{0}', space=sflag, size = 0x8, scoped, tag = 'scoped memory for tpu_custom_call.1']
    %12 = vsyncpa [#allocation3], 0
    %s13 = scalar_lea.sflag [#allocation3], 1
    %14 = vsyncpa %s13, 0
    %15 = vsyncpa [#allocation5], 0
    %s16 = scalar_lea.sflag [#allocation5], 1
    %17 = vsyncpa %s16, 0
    loop: start=0, step=1, limit=4
    $region2: #{tpu_custom_call.1} parent=1 // loop_pre_header
      _
    $region3: #{tpu_custom_call.1} parent=1 // loop_header
      %s19 = sphi 0, %s23
      %p20 = scmp.ge.s32.totalorder %s19, 4
      %s29 = sphi 0, %s31
      %s32 = sphi 0, %s29
      %s33 = sphi 0, %s32
      %s49 = sphi 0, %s33
      %s55 = sphi 0, %s57
      %s58 = sphi 0, %s55
      %s59 = sphi 0, %s58
      %s75 = sphi 0, %s59
      %s79 = sphi 0, %s79
      %s81 = sphi 0, %s79
      %s82 = sphi 0, %s81
      %s96 = sphi 0, %s82
      %s100 = sphi 0, %s100
      %s102 = sphi 0, %s100
      %s103 = sphi 0, %s102
      %s117 = sphi 0, %s103
      %s121 = sphi 0, %s121
      %s123 = sphi 0, %s121
      %s124 = sphi 0, %s123
      %s138 = sphi 0, %s124
      %s144 = sphi 0, %s146
      %s147 = sphi 0, %s144
      %s148 = sphi 0, %s147
      %s164 = sphi 0, %s148
      %s170 = sphi 0, %s172
      %s173 = sphi 0, %s170
      %s174 = sphi 0, %s173
      %s190 = sphi 0, %s174
    $region4: #{tpu_custom_call.1} parent=1 // loop_header_branch
      %22 = sbr.rel (%p20) target = $region8
    $region5: #{tpu_custom_call.1} parent=1 // loop_body
      %s24 = ssub.s32 %s19, 1
      %s25 = ssub.s32 %s19, 2
      %s26 = sadd.s32 %s19, 1
      %s27 = ssub.s32 %s19, %s26
      %p28 = scmp.eq.s32.totalorder %s27, 0
      %s30 = sadd.s32 %s29, 1
      %s31 = scalar_select %p28, %s29, %s30
      %p34 = pneg %p28
      %p35 = scmp.eq.s32.totalorder %s19, 1
      %p36 = por %p34, %p35
      %p37 = scmp.ne.s32.totalorder %s29, %s32
      %p38 = scmp.eq.s32.totalorder %s19, 0
      %p39 = por %p37, %p38
      %p40 = scmp.ne.s32.totalorder %s29, %s32
      %p41 = scmp.eq.s32.totalorder %s24, 1
      %p42 = por %p40, %p41
      %p43 = scmp.ne.s32.totalorder %s32, %s33
      %p44 = scmp.eq.s32.totalorder %s24, 0
      %p45 = por %p43, %p44
      %p46 = scmp.ne.s32.totalorder %s32, %s33
      %p47 = scmp.eq.s32.totalorder %s25, 1
      %p48 = por %p46, %p47
      %p50 = scmp.ne.s32.totalorder %s33, %s49
      %p51 = scmp.eq.s32.totalorder %s25, 0
      %p52 = por %p50, %p51
      %s53 = ssub.s32 %s19, %s26
      %p54 = scmp.eq.s32.totalorder %s53, 0
      %s56 = sadd.s32 %s55, 1
      %s57 = scalar_select %p54, %s55, %s56
      %p60 = pneg %p54
      %p61 = scmp.eq.s32.totalorder %s19, 1
      %p62 = por %p60, %p61
      %p63 = scmp.ne.s32.totalorder %s55, %s58
      %p64 = scmp.eq.s32.totalorder %s19, 0
      %p65 = por %p63, %p64
      %p66 = scmp.ne.s32.totalorder %s55, %s58
      %p67 = scmp.eq.s32.totalorder %s24, 1
      %p68 = por %p66, %p67
      %p69 = scmp.ne.s32.totalorder %s58, %s59
      %p70 = scmp.eq.s32.totalorder %s24, 0
      %p71 = por %p69, %p70
      %p72 = scmp.ne.s32.totalorder %s58, %s59
      %p73 = scmp.eq.s32.totalorder %s25, 1
      %p74 = por %p72, %p73
      %p76 = scmp.ne.s32.totalorder %s59, %s75
      %p77 = scmp.eq.s32.totalorder %s25, 0
      %p78 = por %p76, %p77
      %s80 = sadd.s32 %s79, 1
      %p83 = scmp.eq.s32.totalorder %s19, 1
      %p84 = scmp.ne.s32.totalorder %s79, %s81
      %p85 = scmp.eq.s32.totalorder %s19, 0
      %p86 = por %p84, %p85
      %p87 = scmp.ne.s32.totalorder %s79, %s81
      %p88 = scmp.eq.s32.totalorder %s24, 1
      %p89 = por %p87, %p88
      %p90 = scmp.ne.s32.totalorder %s81, %s82
      %p91 = scmp.eq.s32.totalorder %s24, 0
      %p92 = por %p90, %p91
      %p93 = scmp.ne.s32.totalorder %s81, %s82
      %p94 = scmp.eq.s32.totalorder %s25, 1
      %p95 = por %p93, %p94
      %p97 = scmp.ne.s32.totalorder %s82, %s96
      %p98 = scmp.eq.s32.totalorder %s25, 0
      %p99 = por %p97, %p98
      %s101 = sadd.s32 %s100, 1
      %p104 = scmp.eq.s32.totalorder %s19, 1
      %p105 = scmp.ne.s32.totalorder %s100, %s102
      %p106 = scmp.eq.s32.totalorder %s19, 0
      %p107 = por %p105, %p106
      %p108 = scmp.ne.s32.totalorder %s100, %s102
      %p109 = scmp.eq.s32.totalorder %s24, 1
      %p110 = por %p108, %p109
      %p111 = scmp.ne.s32.totalorder %s102, %s103
      %p112 = scmp.eq.s32.totalorder %s24, 0
      %p113 = por %p111, %p112
      %p114 = scmp.ne.s32.totalorder %s102, %s103
      %p115 = scmp.eq.s32.totalorder %s25, 1
      %p116 = por %p114, %p115
      %p118 = scmp.ne.s32.totalorder %s103, %s117
      %p119 = scmp.eq.s32.totalorder %s25, 0
      %p120 = por %p118, %p119
      %s122 = sadd.s32 %s121, 1
      %p125 = scmp.eq.s32.totalorder %s19, 1
      %p126 = scmp.ne.s32.totalorder %s121, %s123
      %p127 = scmp.eq.s32.totalorder %s19, 0
      %p128 = por %p126, %p127
      %p129 = scmp.ne.s32.totalorder %s121, %s123
      %p130 = scmp.eq.s32.totalorder %s24, 1
      %p131 = por %p129, %p130
      %p132 = scmp.ne.s32.totalorder %s123, %s124
      %p133 = scmp.eq.s32.totalorder %s24, 0
      %p134 = por %p132, %p133
      %p135 = scmp.ne.s32.totalorder %s123, %s124
      %p136 = scmp.eq.s32.totalorder %s25, 1
      %p137 = por %p135, %p136
      %p139 = scmp.ne.s32.totalorder %s124, %s138
      %p140 = scmp.eq.s32.totalorder %s25, 0
      %p141 = por %p139, %p140
      %s142 = ssub.s32 %s19, %s26
      %p143 = scmp.eq.s32.totalorder %s142, 0
      %s145 = sadd.s32 %s144, 1
      %s146 = scalar_select %p143, %s144, %s145
      %p149 = pneg %p143
      %p150 = scmp.eq.s32.totalorder %s19, 1
      %p151 = por %p149, %p150
      %p152 = scmp.ne.s32.totalorder %s144, %s147
      %p153 = scmp.eq.s32.totalorder %s19, 0
      %p154 = por %p152, %p153
      %p155 = scmp.ne.s32.totalorder %s144, %s147
      %p156 = scmp.eq.s32.totalorder %s24, 1
      %p157 = por %p155, %p156
      %p158 = scmp.ne.s32.totalorder %s147, %s148
      %p159 = scmp.eq.s32.totalorder %s24, 0
      %p160 = por %p158, %p159
      %p161 = scmp.ne.s32.totalorder %s147, %s148
      %p162 = scmp.eq.s32.totalorder %s25, 1
      %p163 = por %p161, %p162
      %p165 = scmp.ne.s32.totalorder %s148, %s164
      %p166 = scmp.eq.s32.totalorder %s25, 0
      %p167 = por %p165, %p166
      %s168 = ssub.s32 %s19, %s26
      %p169 = scmp.eq.s32.totalorder %s168, 0
      %s171 = sadd.s32 %s170, 1
      %s172 = scalar_select %p169, %s170, %s171
      %p175 = pneg %p169
      %p176 = scmp.eq.s32.totalorder %s19, 1
      %p177 = por %p175, %p176
      %p178 = scmp.ne.s32.totalorder %s170, %s173
      %p179 = scmp.eq.s32.totalorder %s19, 0
      %p180 = por %p178, %p179
      %p181 = scmp.ne.s32.totalorder %s170, %s173
      %p182 = scmp.eq.s32.totalorder %s24, 1
      %p183 = por %p181, %p182
      %p184 = scmp.ne.s32.totalorder %s173, %s174
      %p185 = scmp.eq.s32.totalorder %s24, 0
      %p186 = por %p184, %p185
      %p187 = scmp.ne.s32.totalorder %s173, %s174
      %p188 = scmp.eq.s32.totalorder %s25, 1
      %p189 = por %p187, %p188
      %p191 = scmp.ne.s32.totalorder %s174, %s190
      %p192 = scmp.eq.s32.totalorder %s25, 0
      %p193 = por %p191, %p192
      %p194 = scmp.le.s32.totalorder 1, %s19
      %p195 = scmp.lt.s32.totalorder %s19, 3
      %p196 = pnand %p194, %p195
      %p197 = pneg %p196
      // Predicated region
      $region9: #{tpu_custom_call.1} parent=5 // pred_check
        _
      $region10: #{tpu_custom_call.1} parent=5 // pred_check_branch
        %199 = sbr.rel (%p196) target = $region12
      $region11: #{tpu_custom_call.1} parent=5 // pred_region
        %s200 = ssub.s32 %s19, 1
        // Predicated region
        $region13: #{tpu_custom_call.1} parent=11 // pred_check
          %p201 = pneg %p92
        $region14: #{tpu_custom_call.1} parent=11 // pred_check_branch
          %203 = sbr.rel (%p201) target = $region16
        $region15: #{tpu_custom_call.1} parent=11 // pred_region
          _
        $region16: #{tpu_custom_call.1} parent=11 // pred_fallthru
          _
        // Predicated region
        $region17: #{tpu_custom_call.1} parent=11 // pred_check
          %p204 = pneg %p113
        $region18: #{tpu_custom_call.1} parent=11 // pred_check_branch
          %206 = sbr.rel (%p204) target = $region20
        $region19: #{tpu_custom_call.1} parent=11 // pred_region
          _
        $region20: #{tpu_custom_call.1} parent=11 // pred_fallthru
          _
        // Predicated region
        $region21: #{tpu_custom_call.1} parent=11 // pred_check
          %p207 = pneg %p134
        $region22: #{tpu_custom_call.1} parent=11 // pred_check_branch
          %209 = sbr.rel (%p207) target = $region24
        $region23: #{tpu_custom_call.1} parent=11 // pred_region
          _
        $region24: #{tpu_custom_call.1} parent=11 // pred_fallthru
          _
      $region12: #{tpu_custom_call.1} parent=5 // pred_fallthru
        _
      %p210 = scmp.lt.s32.totalorder %s19, 2
      // Predicated region
      $region25: #{tpu_custom_call.1} parent=5 // pred_check
        %p211 = pneg %p210
      $region26: #{tpu_custom_call.1} parent=5 // pred_check_branch
        %213 = sbr.rel (%p211) target = $region28
      $region27: #{tpu_custom_call.1} parent=5 // pred_region
        // Predicated region
        $region29: #{tpu_custom_call.1} parent=27 // pred_check
          %p214 = pneg %p39
        $region30: #{tpu_custom_call.1} parent=27 // pred_check_branch
          %216 = sbr.rel (%p214) target = $region32
        $region31: #{tpu_custom_call.1} parent=27 // pred_region
          %p217 = scmp.lt.s32.totalorder %s19, 1
          %s218 = scalar_select %p217, %s19, 1
          %s219 = smul.addr %s218, 8
          %s220 = scalar_lea.vmem %s0, %s219
        $region32: #{tpu_custom_call.1} parent=27 // pred_fallthru
          _
        // Predicated region
        $region33: #{tpu_custom_call.1} parent=27 // pred_check
          %p221 = pneg %p65
        $region34: #{tpu_custom_call.1} parent=27 // pred_check_branch
          %223 = sbr.rel (%p221) target = $region36
        $region35: #{tpu_custom_call.1} parent=27 // pred_region
          %s224 = smul.u32 2, %s19
          %p225 = scmp.lt.s32.totalorder %s224, 3
          %s226 = scalar_select %p225, %s224, 3
          %s227 = smul.addr %s226, 8
          %s228 = scalar_lea.vmem %s1, %s227
          %s229 = smul.u32 2, %s19
        $region36: #{tpu_custom_call.1} parent=27 // pred_fallthru
          _
      $region28: #{tpu_custom_call.1} parent=5 // pred_fallthru
        _
      %p230 = scmp.le.s32.totalorder 1, %s19
      %p231 = scmp.lt.s32.totalorder %s19, 3
      %p232 = pnand %p230, %p231
      %p233 = pneg %p232
      // Predicated region
      $region37: #{tpu_custom_call.1} parent=5 // pred_check
        _
      $region38: #{tpu_custom_call.1} parent=5 // pred_check_branch
        %235 = sbr.rel (%p232) target = $region40
      $region39: #{tpu_custom_call.1} parent=5 // pred_region
        %s236 = ssub.s32 %s19, 1
        %p237 = scmp.lt.s32.totalorder %s24, 1
        %s238 = scalar_select %p237, %s24, 1
        %s239 = smul.addr %s238, 8
        %s240 = scalar_lea.vmem %s0, %s239
        %p241 = pneg %p45
        %p242 = pneg %p42
        %s243 = smul.u32 2, %s24
        %p244 = scmp.lt.s32.totalorder %s243, 3
        %s245 = scalar_select %p244, %s243, 3
        %s246 = smul.addr %s245, 8
        %s247 = scalar_lea.vmem %s1, %s246
        %p248 = pneg %p71
        %p249 = pneg %p68
        %p250 = pneg %p92
        %p251 = pneg %p89
        %p252 = pneg %p113
        %p253 = pneg %p110
        %p254 = pneg %p134
        %p255 = pneg %p131
        %p256 = pneg %p160
        %p257 = pneg %p157
        %s258 = sand.u32 %s147, 1
        %s259 = scalar_lea.sflag [#allocation3], %s258
        %s260 = sand.u32 %s147, 1
        %s261 = smul.addr %s260, 8
        %s262 = scalar_lea.vmem [#allocation2], %s261
        %p263 = pneg %p186
        %p264 = pneg %p183
        %s265 = sand.u32 %s173, 1
        %s266 = scalar_lea.sflag [#allocation5], %s265
        %s267 = sand.u32 %s173, 1
        %s268 = smul.addr %s267, 16
        %s269 = scalar_lea.vmem [#allocation4], %s268
        %p270 = scmp.lt.s32.totalorder %s24, 1
        %s271 = scalar_select %p270, %s24, 1
        %s272 = smul.addr %s271, 8
        %s273 = scalar_lea.vmem %s0, %s272
        %s274 = smul.u32 2, %s24
        %p275 = scmp.lt.s32.totalorder %s274, 3
        %s276 = scalar_select %p275, %s274, 3
        %s277 = smul.addr %s276, 8
        %s278 = scalar_lea.vmem %s1, %s277
        %s279 = smul.u32 2, %s24
        %s280 = smul.u32 2, %s24
        %v281 = vld [vmem:[%s273] sm:$0xff]
        %v282 = vlaneseq
        %v283 = vand.u32 %v282, 127
        %v284 = vadd.s32 %v283, 128
        %285 = vset.pattern.permute.xlu0 0
        %286 = vperm.xlu0 %285, %v281
        %v287 = vpop.permute.xlu0 %286
        %vm288 = vcmp.eq.s32.totalorder %v283, %v287
        %vm289 = vcmp.eq.s32.totalorder %v284, %v287
        %290 = vset.pattern.permute.xlu0 1
        %291 = vperm.xlu0 %290, %v281
        %v292 = vpop.permute.xlu0 %291
        %vm293 = vcmp.eq.s32.totalorder %v283, %v292
        %vm294 = vcmp.eq.s32.totalorder %v284, %v292
        %vm295 = vmor %vm288, %vm293
        %vm296 = vmor %vm289, %vm294
        %297 = vset.pattern.permute.xlu0 2
        %298 = vperm.xlu0 %297, %v281
        %v299 = vpop.permute.xlu0 %298
        %vm300 = vcmp.eq.s32.totalorder %v283, %v299
        %vm301 = vcmp.eq.s32.totalorder %v284, %v299
        %vm302 = vmor %vm295, %vm300
        %vm303 = vmor %vm296, %vm301
        %v304 = vsel %vm302, 1, 0
        %v305 = vsel %vm303, 1, 0
        %v306 = vcvt.s32.f32 %v304
        %v307 = vcvt.s32.f32 %v305
        %v308 = vld [vmem:[%s3] sm:$0xff]
        %v309 = vld [vmem:[%s3 + $0x8] sm:$0xff]
        %v310 = vld [vmem:[%s3 + $0x10] sm:$0xff]
        %v311 = vld [vmem:[%s3 + $0x18] sm:$0xff]
        %v312 = vld [vmem:[%s3 + $0x20] sm:$0xff]
        %v313 = vld [vmem:[%s3 + $0x28] sm:$0xff]
        %v314 = vld [vmem:[%s3 + $0x30] sm:$0xff]
        %v315 = vld [vmem:[%s3 + $0x38] sm:$0xff]
        %v316 = vld [vmem:[%s3 + $0x40] sm:$0xff]
        %v317 = vld [vmem:[%s3 + $0x48] sm:$0xff]
        %v318 = vld [vmem:[%s3 + $0x50] sm:$0xff]
        %v319 = vld [vmem:[%s3 + $0x58] sm:$0xff]
        %v320 = vld [vmem:[%s3 + $0x60] sm:$0xff]
        %v321 = vld [vmem:[%s3 + $0x68] sm:$0xff]
        %v322 = vld [vmem:[%s3 + $0x70] sm:$0xff]
        %v323 = vld [vmem:[%s3 + $0x78] sm:$0xff]
        %v324 = vld [vmem:[%s3 + $0x80] sm:$0xff]
        %v325 = vld [vmem:[%s3 + $0x88] sm:$0xff]
        %v326 = vld [vmem:[%s3 + $0x90] sm:$0xff]
        %v327 = vld [vmem:[%s3 + $0x98] sm:$0xff]
        %v328 = vld [vmem:[%s3 + $0xa0] sm:$0xff]
        %v329 = vld [vmem:[%s3 + $0xa8] sm:$0xff]
        %v330 = vld [vmem:[%s3 + $0xb0] sm:$0xff]
        %v331 = vld [vmem:[%s3 + $0xb8] sm:$0xff]
        %v332 = vld [vmem:[%s3 + $0xc0] sm:$0xff]
        %v333 = vld [vmem:[%s3 + $0xc8] sm:$0xff]
        %v334 = vld [vmem:[%s3 + $0xd0] sm:$0xff]
        %vm335 = vcmask 719872
        %v337 = vsel %vm335, %v307, 0
        %339 = vmatpush.msra.mxu0 %v323
        %340 = vmatpush.msra.mxu0 %v322
        %341 = vmatpush.msra.mxu0 %v321
        %342 = vmatpush.msra.mxu0 %v320
        %343 = vmatpush.msra.mxu0 %v319
        %344 = vmatpush.msra.mxu0 %v318
        %345 = vmatpush.msra.mxu0 %v317
        %346 = vmatpush.msra.mxu0 %v316
        %347 = vmatpush.msra.mxu0 %v315
        %348 = vmatpush.msra.mxu0 %v314
        %349 = vmatpush.msra.mxu0 %v313
        %350 = vmatpush.msra.mxu0 %v312
        %351 = vmatpush.msra.mxu0 %v311
        %352 = vmatpush.msra.mxu0 %v310
        %353 = vmatpush.msra.mxu0 %v309
        %354 = vmatpush.msra.mxu0 %v308
        %355 = vmatmul.f32.gmra.mxu0 %v306
        %v356 = vpop.f32.mrf.mxu0
        %v357 = vadd.f32 0.0, %v356
        %358 = vdwg.mxu0
        %359 = vmatpush.msra.mxu0 0.0
        %360 = vmatpush.msra.mxu0 0.0
        %361 = vmatpush.msra.mxu0 0.0
        %362 = vmatpush.msra.mxu0 0.0
        %363 = vmatpush.msra.mxu0 0.0
        %364 = vmatpush.msra.mxu0 %v334
        %365 = vmatpush.msra.mxu0 %v333
        %366 = vmatpush.msra.mxu0 %v332
        %367 = vmatpush.msra.mxu0 %v331
        %368 = vmatpush.msra.mxu0 %v330
        %369 = vmatpush.msra.mxu0 %v329
        %370 = vmatpush.msra.mxu0 %v328
        %371 = vmatpush.msra.mxu0 %v327
        %372 = vmatpush.msra.mxu0 %v326
        %373 = vmatpush.msra.mxu0 %v325
        %374 = vmatpush.msra.mxu0 %v324
        %375 = vmatmul.f32.gmra.mxu0 %v337
        %v376 = vpop.f32.mrf.mxu0
        %v377 = vadd.f32 %v357, %v376
        %378 = vdwg.mxu0
        %vm379 = vcmask 261120
        %380 = vst.msk [vmem:[%s262] sm:$0xff] %vm379, %v377
        %v381 = vld [vmem:[%s278] sm:$0xff]
        %v382 = vld [vmem:[%s278 + $0x8] sm:$0xff]
        %v383 = vld [vmem:[%s2] sm:$0xff]
        %v384 = vld [vmem:[%s2 + $0x8] sm:$0xff]
        %386 = vset.pattern.permute.xlu0 25
        %387 = vperm.xlu0 %386, %v381
        %v388 = vpop.permute.xlu0 %387
        %391 = vset.pattern.permute.xlu0 25
        %392 = vperm.xlu0 %391, %v382
        %v393 = vpop.permute.xlu0 %392
        %vm395 = vcmp.lt.f32.partialorder %v383, %v388
        %vm396 = vcmp.lt.f32.partialorder %v384, %v393
        %v397 = vsel %vm395, 1, 0
        %v398 = vsel %vm396, 1, 0
        %v399 = vcvt.s32.f32 %v397
        %v400 = vcvt.s32.f32 %v398
        %v401 = vmul.f32 %v381, %v399
        %v402 = vmul.f32 %v382, %v400
        %v403 = vld [vmem:[%s4] sm:$0xff]
        %v404 = vld [vmem:[%s4 + $0x8] sm:$0xff]
        %v405 = vld [vmem:[%s4 + $0x10] sm:$0xff]
        %v406 = vld [vmem:[%s4 + $0x18] sm:$0x3]
        %vm407 = vcmask 211968
        %v409 = vsel %vm407, %v401, 0
        %v412 = vsel %vm407, %v402, 0
        %vm414 = vcmask 1041408
        %v416 = vsel %vm414, %v406, 0
        %418 = vmatpush.msra.mxu0 0.0
        %419 = vmatpush.msra.mxu0 0.0
        %420 = vmatpush.msra.mxu0 0.0
        %421 = vmatpush.msra.mxu0 0.0
        %422 = vmatpush.msra.mxu0 0.0
        %423 = vmatpush.msra.mxu0 0.0
        %424 = vmatpush.msra.mxu0 0.0
        %425 = vmatpush.msra.mxu0 0.0
        %426 = vmatpush.msra.mxu0 0.0
        %427 = vmatpush.msra.mxu0 0.0
        %428 = vmatpush.msra.mxu0 0.0
        %429 = vmatpush.msra.mxu0 0.0
        %v430 = vand.u32 %v416, 4294901760
        %431 = vmatpush.msra.mxu0 %v430
        %v432 = vand.u32 %v405, 4294901760
        %433 = vmatpush.msra.mxu0 %v432
        %v434 = vand.u32 %v404, 4294901760
        %435 = vmatpush.msra.mxu0 %v434
        %v436 = vand.u32 %v403, 4294901760
        %437 = vmatpush.msra.mxu0 %v436
        %v438 = vand.u32 %v409, 4294901760
        %v439 = vsub.f32 %v409, %v438
        %v440 = vand.u32 %v439, 4294901760
        %v441 = vsub.f32 %v439, %v440
        %v442 = vand.u32 %v441, 4294901760
        %443 = vmatmul.f32.gmra.mxu0 %v442
        %v444 = vpop.f32.mrf.mxu0
        %v445 = vadd.f32 0.0, %v444
        %v446 = vand.u32 %v412, 4294901760
        %v447 = vsub.f32 %v412, %v446
        %v448 = vand.u32 %v447, 4294901760
        %v449 = vsub.f32 %v447, %v448
        %v450 = vand.u32 %v449, 4294901760
        %451 = vmatmul.f32.gmra.mxu0 %v450
        %v452 = vpop.f32.mrf.mxu0
        %v453 = vadd.f32 0.0, %v452
        %454 = vdwg.mxu0
        %455 = vmatpush.msra.mxu0 0.0
        %456 = vmatpush.msra.mxu0 0.0
        %457 = vmatpush.msra.mxu0 0.0
        %458 = vmatpush.msra.mxu0 0.0
        %459 = vmatpush.msra.mxu0 0.0
        %460 = vmatpush.msra.mxu0 0.0
        %461 = vmatpush.msra.mxu0 0.0
        %462 = vmatpush.msra.mxu0 0.0
        %463 = vmatpush.msra.mxu0 0.0
        %464 = vmatpush.msra.mxu0 0.0
        %465 = vmatpush.msra.mxu0 0.0
        %466 = vmatpush.msra.mxu0 0.0
        %v467 = vand.u32 %v416, 4294901760
        %v468 = vsub.f32 %v416, %v467
        %v469 = vand.u32 %v468, 4294901760
        %v470 = vsub.f32 %v468, %v469
        %v471 = vand.u32 %v470, 4294901760
        %472 = vmatpush.msra.mxu0 %v471
        %v473 = vand.u32 %v405, 4294901760
        %v474 = vsub.f32 %v405, %v473
        %v475 = vand.u32 %v474, 4294901760
        %v476 = vsub.f32 %v474, %v475
        %v477 = vand.u32 %v476, 4294901760
        %478 = vmatpush.msra.mxu0 %v477
        %v479 = vand.u32 %v404, 4294901760
        %v480 = vsub.f32 %v404, %v479
        %v481 = vand.u32 %v480, 4294901760
        %v482 = vsub.f32 %v480, %v481
        %v483 = vand.u32 %v482, 4294901760
        %484 = vmatpush.msra.mxu0 %v483
        %v485 = vand.u32 %v403, 4294901760
        %v486 = vsub.f32 %v403, %v485
        %v487 = vand.u32 %v486, 4294901760
        %v488 = vsub.f32 %v486, %v487
        %v489 = vand.u32 %v488, 4294901760
        %490 = vmatpush.msra.mxu0 %v489
        %v491 = vand.u32 %v409, 4294901760
        %492 = vmatmul.f32.gmra.mxu0 %v491
        %v493 = vpop.f32.mrf.mxu0
        %v494 = vadd.f32 %v445, %v493
        %v495 = vand.u32 %v412, 4294901760
        %496 = vmatmul.f32.gmra.mxu0 %v495
        %v497 = vpop.f32.mrf.mxu0
        %v498 = vadd.f32 %v453, %v497
        %499 = vdwg.mxu0
        %500 = vmatpush.msra.mxu0 0.0
        %501 = vmatpush.msra.mxu0 0.0
        %502 = vmatpush.msra.mxu0 0.0
        %503 = vmatpush.msra.mxu0 0.0
        %504 = vmatpush.msra.mxu0 0.0
        %505 = vmatpush.msra.mxu0 0.0
        %506 = vmatpush.msra.mxu0 0.0
        %507 = vmatpush.msra.mxu0 0.0
        %508 = vmatpush.msra.mxu0 0.0
        %509 = vmatpush.msra.mxu0 0.0
        %510 = vmatpush.msra.mxu0 0.0
        %511 = vmatpush.msra.mxu0 0.0
        %v512 = vand.u32 %v416, 4294901760
        %v513 = vsub.f32 %v416, %v512
        %514 = vmatpush.msra.mxu0 %v513
        %v515 = vand.u32 %v405, 4294901760
        %v516 = vsub.f32 %v405, %v515
        %517 = vmatpush.msra.mxu0 %v516
        %v518 = vand.u32 %v404, 4294901760
        %v519 = vsub.f32 %v404, %v518
        %520 = vmatpush.msra.mxu0 %v519
        %v521 = vand.u32 %v403, 4294901760
        %v522 = vsub.f32 %v403, %v521
        %523 = vmatpush.msra.mxu0 %v522
        %v524 = vand.u32 %v409, 4294901760
        %v525 = vsub.f32 %v409, %v524
        %526 = vmatmul.f32.gmra.mxu0 %v525
        %v527 = vpop.f32.mrf.mxu0
        %v528 = vadd.f32 %v494, %v527
        %v529 = vand.u32 %v412, 4294901760
        %v530 = vsub.f32 %v412, %v529
        %531 = vmatmul.f32.gmra.mxu0 %v530
        %v532 = vpop.f32.mrf.mxu0
        %v533 = vadd.f32 %v498, %v532
        %534 = vdwg.mxu0
        %535 = vmatpush.msra.mxu0 0.0
        %536 = vmatpush.msra.mxu0 0.0
        %537 = vmatpush.msra.mxu0 0.0
        %538 = vmatpush.msra.mxu0 0.0
        %539 = vmatpush.msra.mxu0 0.0
        %540 = vmatpush.msra.mxu0 0.0
        %541 = vmatpush.msra.mxu0 0.0
        %542 = vmatpush.msra.mxu0 0.0
        %543 = vmatpush.msra.mxu0 0.0
        %544 = vmatpush.msra.mxu0 0.0
        %545 = vmatpush.msra.mxu0 0.0
        %546 = vmatpush.msra.mxu0 0.0
        %v547 = vand.u32 %v416, 4294901760
        %548 = vmatpush.msra.mxu0 %v547
        %v549 = vand.u32 %v405, 4294901760
        %550 = vmatpush.msra.mxu0 %v549
        %v551 = vand.u32 %v404, 4294901760
        %552 = vmatpush.msra.mxu0 %v551
        %v553 = vand.u32 %v403, 4294901760
        %554 = vmatpush.msra.mxu0 %v553
        %v555 = vand.u32 %v409, 4294901760
        %v556 = vsub.f32 %v409, %v555
        %v557 = vand.u32 %v556, 4294901760
        %558 = vmatmul.f32.gmra.mxu0 %v557
        %v559 = vpop.f32.mrf.mxu0
        %v560 = vadd.f32 %v528, %v559
        %v561 = vand.u32 %v412, 4294901760
        %v562 = vsub.f32 %v412, %v561
        %v563 = vand.u32 %v562, 4294901760
        %564 = vmatmul.f32.gmra.mxu0 %v563
        %v565 = vpop.f32.mrf.mxu0
        %v566 = vadd.f32 %v533, %v565
        %567 = vdwg.mxu0
        %568 = vmatpush.msra.mxu0 0.0
        %569 = vmatpush.msra.mxu0 0.0
        %570 = vmatpush.msra.mxu0 0.0
        %571 = vmatpush.msra.mxu0 0.0
        %572 = vmatpush.msra.mxu0 0.0
        %573 = vmatpush.msra.mxu0 0.0
        %574 = vmatpush.msra.mxu0 0.0
        %575 = vmatpush.msra.mxu0 0.0
        %576 = vmatpush.msra.mxu0 0.0
        %577 = vmatpush.msra.mxu0 0.0
        %578 = vmatpush.msra.mxu0 0.0
        %579 = vmatpush.msra.mxu0 0.0
        %v580 = vand.u32 %v416, 4294901760
        %v581 = vsub.f32 %v416, %v580
        %v582 = vand.u32 %v581, 4294901760
        %583 = vmatpush.msra.mxu0 %v582
        %v584 = vand.u32 %v405, 4294901760
        %v585 = vsub.f32 %v405, %v584
        %v586 = vand.u32 %v585, 4294901760
        %587 = vmatpush.msra.mxu0 %v586
        %v588 = vand.u32 %v404, 4294901760
        %v589 = vsub.f32 %v404, %v588
        %v590 = vand.u32 %v589, 4294901760
        %591 = vmatpush.msra.mxu0 %v590
        %v592 = vand.u32 %v403, 4294901760
        %v593 = vsub.f32 %v403, %v592
        %v594 = vand.u32 %v593, 4294901760
        %595 = vmatpush.msra.mxu0 %v594
        %v596 = vand.u32 %v409, 4294901760
        %597 = vmatmul.f32.gmra.mxu0 %v596
        %v598 = vpop.f32.mrf.mxu0
        %v599 = vadd.f32 %v560, %v598
        %v600 = vand.u32 %v412, 4294901760
        %601 = vmatmul.f32.gmra.mxu0 %v600
        %v602 = vpop.f32.mrf.mxu0
        %v603 = vadd.f32 %v566, %v602
        %604 = vdwg.mxu0
        %605 = vmatpush.msra.mxu0 0.0
        %606 = vmatpush.msra.mxu0 0.0
        %607 = vmatpush.msra.mxu0 0.0
        %608 = vmatpush.msra.mxu0 0.0
        %609 = vmatpush.msra.mxu0 0.0
        %610 = vmatpush.msra.mxu0 0.0
        %611 = vmatpush.msra.mxu0 0.0
        %612 = vmatpush.msra.mxu0 0.0
        %613 = vmatpush.msra.mxu0 0.0
        %614 = vmatpush.msra.mxu0 0.0
        %615 = vmatpush.msra.mxu0 0.0
        %616 = vmatpush.msra.mxu0 0.0
        %v617 = vand.u32 %v416, 4294901760
        %618 = vmatpush.msra.mxu0 %v617
        %v619 = vand.u32 %v405, 4294901760
        %620 = vmatpush.msra.mxu0 %v619
        %v621 = vand.u32 %v404, 4294901760
        %622 = vmatpush.msra.mxu0 %v621
        %v623 = vand.u32 %v403, 4294901760
        %624 = vmatpush.msra.mxu0 %v623
        %v625 = vand.u32 %v409, 4294901760
        %626 = vmatmul.f32.gmra.mxu0 %v625
        %v627 = vpop.f32.mrf.mxu0
        %v628 = vadd.f32 %v599, %v627
        %v629 = vand.u32 %v412, 4294901760
        %630 = vmatmul.f32.gmra.mxu0 %v629
        %v631 = vpop.f32.mrf.mxu0
        %v632 = vadd.f32 %v603, %v631
        %633 = vdwg.mxu0
        %634 = vst [vmem:[%s269] sm:$0xff] %v628
        %635 = vst [vmem:[%s269 + $0x8] sm:$0xff] %v632
        %s636 = sand.u32 %s147, 1
        %s637 = scalar_lea.sflag [#allocation3], %s636
        %s638 = sand.u32 %s147, 1
        %s639 = smul.addr %s638, 8
        %s640 = scalar_lea.vmem [#allocation2], %s639
        %s641 = sand.u32 %s173, 1
        %s642 = scalar_lea.sflag [#allocation5], %s641
        %s643 = sand.u32 %s173, 1
        %s644 = smul.addr %s643, 16
        %s645 = scalar_lea.vmem [#allocation4], %s644
        // Predicated region
        $region41: #{tpu_custom_call.1} parent=39 // pred_check
          %p646 = pneg %p157
        $region42: #{tpu_custom_call.1} parent=39 // pred_check_branch
          %648 = sbr.rel (%p646) target = $region44
        $region43: #{tpu_custom_call.1} parent=39 // pred_region
          %650 = vsyncadd %s637, 0
          %s651 = smul.addr %s24, 8
          %s652 = scalar_lea.hbm %s5, %s651
          %s654 = sshll.u32 %s640, 4
          %s655 = int_to_ptr.vmem [resolvable:$true] %s654
          %s656 = sshll.u32 %s652, 4
          %s657 = int_to_ptr.hbm [resolvable:$true] %s656
          %659 = dma.vmem_to_hbm [thread:$0]  %s655, 128, %s657, %s637
        $region44: #{tpu_custom_call.1} parent=39 // pred_fallthru
          _
        // Predicated region
        $region45: #{tpu_custom_call.1} parent=39 // pred_check
          %p660 = pneg %p183
        $region46: #{tpu_custom_call.1} parent=39 // pred_check_branch
          %662 = sbr.rel (%p660) target = $region48
        $region47: #{tpu_custom_call.1} parent=39 // pred_region
          %s663 = smul.u32 2, %s24
          %665 = vsyncadd %s642, 0
          %s666 = smul.addr %s663, 8
          %s667 = scalar_lea.hbm %s6, %s666
          %s668 = sshll.u32 %s645, 4
          %s669 = int_to_ptr.vmem [resolvable:$true] %s668
          %s670 = sshll.u32 %s667, 4
          %s671 = int_to_ptr.hbm [resolvable:$true] %s670
          %676 = dma.vmem_to_hbm [thread:$0]  %s669, 256, %s671, %s642, 128, 128, 8
        $region48: #{tpu_custom_call.1} parent=39 // pred_fallthru
          _
      $region40: #{tpu_custom_call.1} parent=5 // pred_fallthru
        _
      %p677 = scmp.le.s32.totalorder 2, %s19
      // Predicated region
      $region49: #{tpu_custom_call.1} parent=5 // pred_check
        %p678 = pneg %p677
      $region50: #{tpu_custom_call.1} parent=5 // pred_check_branch
        %680 = sbr.rel (%p678) target = $region52
      $region51: #{tpu_custom_call.1} parent=5 // pred_region
        %s681 = ssub.s32 %s19, 2
        // Predicated region
        $region53: #{tpu_custom_call.1} parent=51 // pred_check
          %p682 = pneg %p163
        $region54: #{tpu_custom_call.1} parent=51 // pred_check_branch
          %684 = sbr.rel (%p682) target = $region56
        $region55: #{tpu_custom_call.1} parent=51 // pred_region
          %s685 = sand.u32 %s148, 1
          %s686 = scalar_lea.sflag [#allocation3], %s685
          %s687 = sand.u32 %s148, 1
          %s688 = smul.addr %s687, 8
          %s689 = scalar_lea.vmem [#allocation2], %s688
          %691 = dma.done %s686, 128
        $region56: #{tpu_custom_call.1} parent=51 // pred_fallthru
          _
        // Predicated region
        $region57: #{tpu_custom_call.1} parent=51 // pred_check
          %p692 = pneg %p189
        $region58: #{tpu_custom_call.1} parent=51 // pred_check_branch
          %694 = sbr.rel (%p692) target = $region60
        $region59: #{tpu_custom_call.1} parent=51 // pred_region
          %s695 = sand.u32 %s174, 1
          %s696 = scalar_lea.sflag [#allocation5], %s695
          %s697 = sand.u32 %s174, 1
          %s698 = smul.addr %s697, 16
          %s699 = scalar_lea.vmem [#allocation4], %s698
          %701 = dma.done %s696, 256
        $region60: #{tpu_custom_call.1} parent=51 // pred_fallthru
          _
      $region52: #{tpu_custom_call.1} parent=5 // pred_fallthru
        _
    $region6: #{tpu_custom_call.1} parent=1 // loop_footer
      %s23 = sadd.s32 1, %s19
    $region7: #{tpu_custom_call.1} parent=1 // loop_footer_branch
      %18 = sbr.rel target = $region3
    $region8: #{tpu_custom_call.1} parent=1 // loop_exit
      _
    %702 = vsyncpa [#allocation3], 1
    %s703 = scalar_lea.sflag [#allocation3], 1
    %704 = vsyncpa %s703, 1
    %705 = vsyncpa [#allocation5], 1
    %s706 = scalar_lea.sflag [#allocation5], 1
    %707 = vsyncpa %s706, 1

</llo_original>
